<compile_context>
chip_gen: v7x
topology: tpu7x:2x2x1
jax: 0.10.0
libtpu: 0.0.40
codegen_flags: <defaults>
</compile_context>

<pallas_src>
import functools

import jax
import jax.numpy as jnp
from jax.experimental import pallas as pl
from jax.experimental.pallas import tpu as pltpu


def _triplet_loss_kernel(a_ref, p_ref, n_ref, o_ref, *, margin, n_rows,
                         tile_n, has_tail):
    # Upcast to f32 for the reduction (required on v5e; cheap VPU filler elsewhere).
    a = a_ref[...].astype(jnp.float32)
    p = p_ref[...].astype(jnp.float32)
    n = n_ref[...].astype(jnp.float32)

    # ap - an = sum((a-p)^2 - (a-n)^2, axis=1): one cross-lane reduction.
    d_ap = a - p
    d_an = a - n
    diff = jnp.sum(d_ap * d_ap - d_an * d_an, axis=1, keepdims=True)  # (tile_n, 1)

    # losses = relu(ap - an + margin)
    losses = jnp.maximum(diff + margin, 0.0)  # (tile_n, 1)

    if has_tail:
        # Mask padded rows of the last (possibly partial) tile so garbage in the
        # out-of-bounds portion of the block never enters the sum.
        row = (pl.program_id(0) * tile_n
               + jax.lax.broadcasted_iota(jnp.int32, (tile_n, 1), 0))
        losses = jnp.where(row < n_rows, losses, 0.0)

    # Per-tile partial sum, written lane-dense (same value in all 128 lanes;
    # the wrapper only reads lane 0).  Keeps the store an unmasked vst.
    partial = jnp.sum(losses)
    o_ref[...] = jnp.full((1, 128), partial, dtype=jnp.float32)


def _choose_tile_n(n_rows, feat_dim, itemsize=4):
    """Pick a batch tile: <= ~2 MiB per input block (3 inputs x 2 buffers
    => <= ~12 MiB VMEM, under the 16 MiB v5e scoped default), multiple of 8,
    capped at 1024 rows to amortize per-grid-step overhead."""
    budget_bytes = 2 * 1024 * 1024
    t = budget_bytes // max(1, feat_dim * itemsize)
    t = max(8, min(1024, (t // 8) * 8))
    if t >= n_rows:
        return n_rows  # full-array block: always layout-legal
    return t


def triplet_loss(anchor, positive, negative, labels=None, *, margin=1.0,
                 tile_n=None):
    """Pallas TPU implementation of TripletLoss.forward.

    anchor, positive, negative: (N, D) arrays (f32 or bf16).  labels is
    ignored (as in the reference forward pass).  Returns a scalar f32 loss.
    """
    del labels  # unused by the reference forward pass
    N, D = anchor.shape
    if tile_n is None:
        tile_n = _choose_tile_n(N, D, jnp.dtype(anchor.dtype).itemsize)
    tile_n = int(tile_n)
    num_tiles = pl.cdiv(N, tile_n)
    has_tail = (N % tile_n) != 0

    kernel = functools.partial(
        _triplet_loss_kernel, margin=float(margin), n_rows=N, tile_n=tile_n,
        has_tail=has_tail)

    partials = pl.pallas_call(
        kernel,
        out_shape=jax.ShapeDtypeStruct((num_tiles, 128), jnp.float32),
        grid_spec=pltpu.PrefetchScalarGridSpec(
            num_scalar_prefetch=0,
            grid=(num_tiles,),
            in_specs=[
                pl.BlockSpec((tile_n, D), lambda i: (i, 0)),
                pl.BlockSpec((tile_n, D), lambda i: (i, 0)),
                pl.BlockSpec((tile_n, D), lambda i: (i, 0)),
            ],
            out_specs=pl.BlockSpec((1, 128), lambda i: (i, 0)),
        ),
        compiler_params=pltpu.CompilerParams(
            # Batch tiles are independent -> shard across both v7x TensorCores.
            dimension_semantics=("parallel",),
        ),
    )(anchor, positive, negative)

    # Finish the mean on the host-side graph: sum of per-tile partials / true N.
    return jnp.sum(partials[:, 0]) / jnp.float32(N)


def _reference(anchor, positive, negative, margin):
    a = anchor.astype(jnp.float32)
    p = positive.astype(jnp.float32)
    n = negative.astype(jnp.float32)
    ap = jnp.sum((a - p) ** 2, axis=1)
    an = jnp.sum((a - n) ** 2, axis=1)
    return jnp.mean(jnp.maximum(ap - an + margin, 0.0))


if __name__ == "__main__":
    key = jax.random.PRNGKey(0)
    margin = 1.0

    # --- Small case (matches the module's toy shapes): single full-array tile.
    k1, k2, k3 = jax.random.split(key, 3)
    N, D = 8, 32
    anchor = jax.random.normal(k1, (N, D), dtype=jnp.float32)
    positive = jax.random.normal(k2, (N, D), dtype=jnp.float32)
    negative = jax.random.normal(k3, (N, D), dtype=jnp.float32)
    labels = jnp.zeros((N,), dtype=jnp.int32)  # unused, API parity only

    loss = triplet_loss(anchor, positive, negative, labels, margin=margin)
    jax.block_until_ready(loss)
    ref = _reference(anchor, positive, negative, margin)
    assert jnp.allclose(loss, ref, rtol=1e-4, atol=1e-4), (loss, ref)

    # --- Larger case with a forced small tile to exercise the multi-tile path
    #     + tail-row masking (N not a multiple of tile_n).
    k4, k5, k6 = jax.random.split(jax.random.PRNGKey(1), 3)
    N2, D2 = 300, 128
    a2 = jax.random.normal(k4, (N2, D2), dtype=jnp.float32)
    p2 = jax.random.normal(k5, (N2, D2), dtype=jnp.float32)
    n2 = jax.random.normal(k6, (N2, D2), dtype=jnp.float32)

    loss2 = triplet_loss(a2, p2, n2, None, margin=margin, tile_n=128)
    jax.block_until_ready(loss2)
    ref2 = _reference(a2, p2, n2, margin)
    assert jnp.allclose(loss2, ref2, rtol=1e-4, atol=1e-4), (loss2, ref2)

    # --- bf16 inputs (halves HBM traffic; kernel upcasts to f32 internally).
    loss3 = triplet_loss(a2.astype(jnp.bfloat16), p2.astype(jnp.bfloat16),
                         n2.astype(jnp.bfloat16), None, margin=margin,
                         tile_n=128)
    jax.block_until_ready(loss3)
    ref3 = _reference(a2.astype(jnp.bfloat16), p2.astype(jnp.bfloat16),
                      n2.astype(jnp.bfloat16), margin)
    assert jnp.allclose(loss3, ref3, rtol=2e-2, atol=2e-2), (loss3, ref3)

    print("KERNEL_OK")
</pallas_src>

<mosaic_0001>
module attributes {stable_mosaic.version = 11 : i64} {
  func.func @_triplet_loss_kernel(%arg0: i32, %arg1: memref<8x32xf32, #tpu.memory_space<vmem>>, %arg2: memref<8x32xf32, #tpu.memory_space<vmem>>, %arg3: memref<8x32xf32, #tpu.memory_space<vmem>>, %arg4: memref<1x128xf32, #tpu.memory_space<vmem>>) attributes {dimension_semantics = [#tpu.dimension_semantics<parallel>], iteration_bounds = array<i64: 1>, scalar_prefetch = 0 : i64, scratch_operands = 0 : i64, tpu.core_type = #tpu.core_type<tc>, window_params = [{transform_indices = @transform_0, window_bounds = array<i64: 8, 32>}, {transform_indices = @transform_1, window_bounds = array<i64: 8, 32>}, {transform_indices = @transform_2, window_bounds = array<i64: 8, 32>}, {transform_indices = @transform_3, window_bounds = array<i64: 1, 128>}]} {
    %c0 = arith.constant 0 : index
    %c0_0 = arith.constant 0 : index
    %0 = vector.load %arg1[%c0, %c0_0] : memref<8x32xf32, #tpu.memory_space<vmem>>, vector<8x32xf32>
    %c0_1 = arith.constant 0 : index
    %c0_2 = arith.constant 0 : index
    %1 = vector.load %arg2[%c0_1, %c0_2] : memref<8x32xf32, #tpu.memory_space<vmem>>, vector<8x32xf32>
    %c0_3 = arith.constant 0 : index
    %c0_4 = arith.constant 0 : index
    %2 = vector.load %arg3[%c0_3, %c0_4] : memref<8x32xf32, #tpu.memory_space<vmem>>, vector<8x32xf32>
    %3 = arith.subf %0, %1 : vector<8x32xf32>
    %4 = arith.subf %0, %2 : vector<8x32xf32>
    %5 = arith.mulf %3, %3 : vector<8x32xf32>
    %6 = arith.mulf %4, %4 : vector<8x32xf32>
    %7 = arith.subf %5, %6 : vector<8x32xf32>
    %cst = arith.constant dense<0.000000e+00> : vector<8xf32>
    %8 = vector.multi_reduction <add>, %7, %cst [1] : vector<8x32xf32> to vector<8xf32>
    %9 = vector.shape_cast %8 : vector<8xf32> to vector<8x1xf32>
    %cst_5 = arith.constant 1.000000e+00 : f32
    %10 = vector.broadcast %cst_5 : f32 to vector<8x1xf32>
    %11 = arith.addf %9, %10 : vector<8x1xf32>
    %cst_6 = arith.constant 0.000000e+00 : f32
    %12 = vector.broadcast %cst_6 : f32 to vector<8x1xf32>
    %13 = arith.maximumf %11, %12 : vector<8x1xf32>
    %14 = vector.shape_cast %13 : vector<8x1xf32> to vector<1x8x1xf32>
    %cst_7 = arith.constant dense<0.000000e+00> : vector<1xf32>
    %15 = vector.multi_reduction <add>, %14, %cst_7 [1, 2] : vector<1x8x1xf32> to vector<1xf32>
    %16 = vector.shape_cast %15 : vector<1xf32> to vector<1x1x1xf32>
    %17 = vector.extract %16[0, 0, 0] : f32 from vector<1x1x1xf32>
    %18 = vector.broadcast %17 : f32 to vector<1x128xf32>
    %c0_8 = arith.constant 0 : index
    %c0_9 = arith.constant 0 : index
    %19 = vector.load %arg4[%c0_8, %c0_9] : memref<1x128xf32, #tpu.memory_space<vmem>>, vector<1x128xf32>
    tpu.vector_store %arg4[%c0_8, %c0_9], %18 {strides = array<i32>} : memref<1x128xf32, #tpu.memory_space<vmem>>, vector<1x128xf32>,
    return
  }
  func.func @transform_0(%arg0: i32) -> (i32, i32) {
    %c0_i32 = arith.constant 0 : i32
    %c0_i32_0 = arith.constant 0 : i32
    return %arg0, %c0_i32 : i32, i32
  }
  func.func @transform_1(%arg0: i32) -> (i32, i32) {
    %c0_i32 = arith.constant 0 : i32
    %c0_i32_0 = arith.constant 0 : i32
    return %arg0, %c0_i32 : i32, i32
  }
  func.func @transform_2(%arg0: i32) -> (i32, i32) {
    %c0_i32 = arith.constant 0 : i32
    %c0_i32_0 = arith.constant 0 : i32
    return %arg0, %c0_i32 : i32, i32
  }
  func.func @transform_3(%arg0: i32) -> (i32, i32) {
    %c0_i32 = arith.constant 0 : i32
    %c0_i32_0 = arith.constant 0 : i32
    return %arg0, %c0_i32 : i32, i32
  }
}

</mosaic_0001>

<llo_original>
// kernel: tpu_custom_call.1
$region0: #{tpu_custom_call.1}
  #allocation0 [shape = 'u32[]', space=smem, size = 0x4, offset = 0x4, fixed_abs, tag = 'smem constant byte address 0x4 - core index']
  #allocation1 [shape = 'u32[144,128]{1,0:T(1,128)}', space=vmem, size = 0x12000, scoped, tag = 'internal scratch']
  %s0 = inlined_call_operand.hbm [shape: f32[8,32], index: 0, kind: input, shape index: {}]
  %s1 = inlined_call_operand.hbm [shape: f32[8,32], index: 1, kind: input, shape index: {}]
  %s2 = inlined_call_operand.hbm [shape: f32[8,32], index: 2, kind: input, shape index: {}]
  %s3 = inlined_call_operand.hbm [shape: f32[1,128], index: 3, kind: output, shape index: {}]
  %s4 = sld [smem:[#allocation0]]
  $region34: #{tpu_custom_call.1} parent=0
    _
  %s6 = ssub.s32 1, %s4
  %s7 = scalar_select 0, %s6, %s4
  $region1: #{tpu_custom_call.1} parent=0
    #allocation2 [shape = 'u8[4096]{0}', space=vmem, size = 0x1000, scoped, tag = 'input window, operand 0, single buffered']
    #allocation3 [shape = 's32[1]{0}', space=sflag, size = 0x4, scoped, tag = 'scoped memory for tpu_custom_call.1']
    #allocation4 [shape = 's32[1]{0}', space=sflag, size = 0x4, scoped, tag = 'scoped memory for tpu_custom_call.1']
    #allocation5 [shape = 'u8[4096]{0}', space=vmem, size = 0x1000, scoped, tag = 'input window, operand 1, single buffered']
    #allocation6 [shape = 's32[1]{0}', space=sflag, size = 0x4, scoped, tag = 'scoped memory for tpu_custom_call.1']
    #allocation7 [shape = 'u8[4096]{0}', space=vmem, size = 0x1000, scoped, tag = 'input window, operand 2, single buffered']
    #allocation8 [shape = 'u8[512]{0}', space=vmem, size = 0x400, scoped, tag = 'output window, operand 0, single buffered']
    %8 = vsyncpa [#allocation3], 0
    %9 = vsyncpa [#allocation6], 0
    %10 = vsyncpa [#allocation4], 0
    // Predicated region
    $region2: #{tpu_custom_call.1} parent=1 // pred_check
      _
    $region3: #{tpu_custom_call.1} parent=1 // pred_check_branch
      %12 = sbr.rel (0) target = $region5
    $region4: #{tpu_custom_call.1} parent=1 // pred_region
      %s14 = ssub.s32 128, 128
      %15 = vsyncadd [#allocation3], %s14
      %s17 = sshll.u32 [#allocation2], 4
      %s18 = int_to_ptr.vmem [resolvable:$true] %s17
      %20 = dma.hbm_to_vmem [thread:$0]  %s0, 128, %s18, [#allocation3]
    $region5: #{tpu_custom_call.1} parent=1 // pred_fallthru
      _
    // Predicated region
    $region6: #{tpu_custom_call.1} parent=1 // pred_check
      _
    $region7: #{tpu_custom_call.1} parent=1 // pred_check_branch
      %22 = sbr.rel (0) target = $region9
    $region8: #{tpu_custom_call.1} parent=1 // pred_region
      %s24 = ssub.s32 128, 128
      %25 = vsyncadd [#allocation6], %s24
      %s27 = sshll.u32 [#allocation5], 4
      %s28 = int_to_ptr.vmem [resolvable:$true] %s27
      %30 = dma.hbm_to_vmem [thread:$0]  %s1, 128, %s28, [#allocation6]
    $region9: #{tpu_custom_call.1} parent=1 // pred_fallthru
      _
    // Predicated region
    $region10: #{tpu_custom_call.1} parent=1 // pred_check
      _
    $region11: #{tpu_custom_call.1} parent=1 // pred_check_branch
      %32 = sbr.rel (0) target = $region13
    $region12: #{tpu_custom_call.1} parent=1 // pred_region
      %s34 = ssub.s32 128, 128
      %35 = vsyncadd [#allocation6], %s34
      %s37 = sshll.u32 [#allocation7], 4
      %s38 = int_to_ptr.vmem [resolvable:$true] %s37
      %40 = dma.hbm_to_vmem [thread:$0]  %s2, 128, %s38, [#allocation6]
    $region13: #{tpu_custom_call.1} parent=1 // pred_fallthru
      _
    // Predicated region
    $region14: #{tpu_custom_call.1} parent=1 // pred_check
      _
    $region15: #{tpu_custom_call.1} parent=1 // pred_check_branch
      %42 = sbr.rel (0) target = $region17
    $region16: #{tpu_custom_call.1} parent=1 // pred_region
      %43 = dma.done [#allocation3], 128
    $region17: #{tpu_custom_call.1} parent=1 // pred_fallthru
      _
    // Predicated region
    $region18: #{tpu_custom_call.1} parent=1 // pred_check
      _
    $region19: #{tpu_custom_call.1} parent=1 // pred_check_branch
      %45 = sbr.rel (0) target = $region21
    $region20: #{tpu_custom_call.1} parent=1 // pred_region
      %46 = dma.done [#allocation6], 128
    $region21: #{tpu_custom_call.1} parent=1 // pred_fallthru
      _
    // Predicated region
    $region22: #{tpu_custom_call.1} parent=1 // pred_check
      _
    $region23: #{tpu_custom_call.1} parent=1 // pred_check_branch
      %48 = sbr.rel (0) target = $region25
    $region24: #{tpu_custom_call.1} parent=1 // pred_region
      %49 = dma.done [#allocation6], 128
    $region25: #{tpu_custom_call.1} parent=1 // pred_fallthru
      _
    %v50 = vld [vmem:[#allocation2] sm:$0xff]
    %v51 = vld [vmem:[#allocation5] sm:$0xff]
    %v52 = vld [vmem:[#allocation7] sm:$0xff]
    %v53 = vsub.f32 %v50, %v51
    %v54 = vsub.f32 %v50, %v52
    %v55 = vmul.f32 %v53, %v53
    %v56 = vmul.f32 %v54, %v54
    %v57 = vsub.f32 %v55, %v56
    %vm58 = vcmask 261120
    %v59 = vsel %vm58, %v57, 0.0
    %60 = vadd.xlane.f32.xlu0 %v59
    %v61 = vpop.xlane.xlu0 %60
    %v62 = vadd.f32 %v61, 1.0
    %v63 = vmax.f32 %v62, 0.0
    %vm64 = vcmask 7168
    %v65 = vsel %vm64, %v63, 0.0
    %66 = vadd.xlane.f32.xlu0 %v65
    %v67 = vpop.xlane.xlu0 %66
    %v68 = vrot.slane %v67, 4
    %v69 = vadd.f32 %v67, %v68
    %v70 = vrot.slane %v69, 2
    %v71 = vadd.f32 %v69, %v70
    %v72 = vrot.slane %v71, 1
    %v73 = vadd.f32 %v71, %v72
    %s74 = vtos %v73
    %v75 = vstv %s74
    %76 = vst [vmem:[#allocation8] sm:$0x1] %v75
    // Predicated region
    $region26: #{tpu_custom_call.1} parent=1 // pred_check
      _
    $region27: #{tpu_custom_call.1} parent=1 // pred_check_branch
      %78 = sbr.rel (0) target = $region29
    $region28: #{tpu_custom_call.1} parent=1 // pred_region
      %s80 = ssub.s32 16, 16
      %81 = vsyncadd [#allocation4], %s80
      %s83 = sshll.u32 [#allocation8], 4
      %s84 = int_to_ptr.vmem [resolvable:$true] %s83
      %86 = dma.vmem_to_hbm [thread:$0]  %s84, 16, %s3, [#allocation4]
    $region29: #{tpu_custom_call.1} parent=1 // pred_fallthru
      _
    // Predicated region
    $region30: #{tpu_custom_call.1} parent=1 // pred_check
      _
    $region31: #{tpu_custom_call.1} parent=1 // pred_check_branch
      %88 = sbr.rel (0) target = $region33
    $region32: #{tpu_custom_call.1} parent=1 // pred_region
      %89 = dma.done [#allocation4], 16
    $region33: #{tpu_custom_call.1} parent=1 // pred_fallthru
      _
    %90 = vsyncpa [#allocation3], 1
    %91 = vsyncpa [#allocation6], 1
    %92 = vsyncpa [#allocation4], 1

</llo_original>
